<compile_context>
chip_gen: v6e
topology: v6e:2x2x1
jax: 0.10.0
libtpu: 0.0.40
codegen_flags: <defaults>
</compile_context>

<pallas_src>
import functools

import jax
import jax.numpy as jnp
from jax.experimental import pallas as pl
from jax.experimental.pallas import tpu as pltpu

_LANES = 128   # output emitted lane-dense as [*, 128]; wrapper slices [:, :1]


# ----------------------------------------------------------------------------
# Tiling helpers
# ----------------------------------------------------------------------------
def _vmem_capacity_bytes():
    try:
        return int(pltpu.get_tpu_info().vmem_capacity_bytes)
    except Exception:
        return 64 * 2**20          # conservative default (v7x per-TC VMEM)


def _choose_batch_tile(B):
    """Batch tile. Keep >= 2 batch blocks whenever B >= 2 so the 'parallel'
    batch grid axis can be sharded across both TensorCores on v7x megacore.
    TB is a leading (non-tiled) block dim everywhere, so any size is legal."""
    if B <= 1:
        return 1
    return min(8, pl.cdiv(B, 2))


def _choose_seq_tile(S, H, TB, x_isz, m_isz, max_seq_tile=None):
    """Seq tile sized against the f32-WIDENED working set:
       2x double-buffered input tile + ~2x [TB, TS, H] f32 intermediates,
    under a generation-aware VMEM ceiling (do NOT size against 128 MiB)."""
    ceiling = min(48 * 2**20, int(_vmem_capacity_bytes() * 0.7))
    per_row = TB * H * (2 * x_isz + 8) + TB * (2 * m_isz + 8)
    budget = max(1 << 20, ceiling - (4 << 20))
    ts = max(8, min(2048, (budget // per_row) // 8 * 8))
    if max_seq_tile is not None:
        ts = max(8, min(ts, max_seq_tile // 8 * 8))
    if S <= ts:
        ts = S                     # one seq tile spanning the full sequence
    required = per_row * ts + (2 << 20)
    vmem_limit = int(min(ceiling, max(32 * 2**20, required)))
    return ts, vmem_limit


# ----------------------------------------------------------------------------
# Kernels
# ----------------------------------------------------------------------------
def _mean_pool_classifier_kernel(x_ref, m_ref, w_ref, b_ref, out_ref,
                                 acc_h, den_acc, *, seq_len, seq_tile,
                                 has_seq_tail):
    """Streaming masked-mean fused with Linear(H, 1).

    Grid = (num_batch_tiles, num_seq_tiles); seq axis is the reduction axis
    (last, "arbitrary"); batch axis is "parallel" (megacore on v7x).
    """
    k = pl.program_id(1)

    @pl.when(k == 0)
    def _init():
        acc_h[...] = jnp.zeros_like(acc_h)
        den_acc[...] = jnp.zeros_like(den_acc)

    x = x_ref[...].astype(jnp.float32)              # [TB, TS, H]
    m = m_ref[...].astype(jnp.float32)              # [TB, TS, 1]
    prod = x * m                                    # VALU, broadcast over H

    if has_seq_tail:
        # Partial edge block: SELECT (not multiply) so OOB/garbage tail data
        # (possibly NaN) cannot leak into the accumulators.
        col = jax.lax.broadcasted_iota(jnp.int32, (1, seq_tile, 1), 1)
        valid = (k * seq_tile + col) < seq_len
        prod = jnp.where(valid, prod, 0.0)
        m = jnp.where(valid, m, 0.0)

    # Seq-axis (sublane) accumulation -> mostly VALU adds; the cross-lane
    # reduction (dot with w) is deferred to the per-batch-tile finalize.
    acc_h[...] += jnp.sum(prod, axis=1)             # [TB, H]
    den_acc[...] += jnp.sum(m, axis=1)              # [TB, 1]

    @pl.when(k == pl.num_programs(1) - 1)
    def _finalize():
        w = w_ref[...].astype(jnp.float32)          # [1, H]
        num = jnp.sum(acc_h[...] * w, axis=-1, keepdims=True)   # [TB, 1]
        den = jnp.maximum(den_acc[...], 1e-9)       # clamp fully-masked rows
        inv = pl.reciprocal(den, approx=True)       # EUP slot
        inv = inv * (2.0 - den * inv)               # one Newton step -> ~f32 exact
        res = num * inv + b_ref[0, 0]               # [TB, 1]
        out_ref[...] = jnp.broadcast_to(res, out_ref.shape).astype(out_ref.dtype)


def _cls_pool_classifier_kernel(x_ref, w_ref, b_ref, out_ref):
    """Linear(H, 1) over the CLS token (seq position 0), fused in-kernel."""
    x = x_ref[:, 0, :].astype(jnp.float32)          # [TB, H]
    w = w_ref[...].astype(jnp.float32)              # [1, H]
    res = jnp.sum(x * w, axis=-1, keepdims=True) + b_ref[0, 0]  # [TB, 1]
    out_ref[...] = jnp.broadcast_to(res, out_ref.shape).astype(out_ref.dtype)


# ----------------------------------------------------------------------------
# Wrapper
# ----------------------------------------------------------------------------
@functools.partial(jax.jit, static_argnames=("pool_type", "_max_seq_tile"))
def fine_tune_head_forward(hidden_states, attention_mask, w, b, *,
                           pool_type="mean", _max_seq_tile=None):
    """Pallas TPU forward of FineTuneHead for pool_type in {"cls", "mean"}.

    Args:
      hidden_states: [B, S, H] activations (float32 or bfloat16).
      attention_mask: [B, S] (mask values are used as weights, like the module).
      w: classifier weight in PyTorch nn.Linear layout, shape [1, H].
      b: classifier bias, shape [1].
      _max_seq_tile: optional static cap on the seq tile (testing / tuning).
    Returns:
      [B, 1] float32 logits.
    """
    B, S, H = hidden_states.shape
    x_isz = jnp.dtype(hidden_states.dtype).itemsize
    TB = _choose_batch_tile(B)
    nb = pl.cdiv(B, TB)

    w2 = w.reshape(1, H)
    b2 = b.reshape(1, 1).astype(jnp.float32)

    if pool_type == "mean":
        m_isz = jnp.dtype(attention_mask.dtype).itemsize
        TS, vmem_limit = _choose_seq_tile(S, H, TB, x_isz, m_isz,
                                          max_seq_tile=_max_seq_tile)
        ns = pl.cdiv(S, TS)
        has_tail = (S % TS) != 0

        # Free reshape: mask becomes [B, S, 1] so TB stays a leading block dim
        # (no (8,128) constraint on it) and the kernel broadcast is direct.
        m3 = attention_mask.reshape(B, S, 1)

        kernel = functools.partial(_mean_pool_classifier_kernel,
                                   seq_len=S, seq_tile=TS,
                                   has_seq_tail=has_tail)

        out = pl.pallas_call(
            kernel,
            out_shape=jax.ShapeDtypeStruct((nb, TB, _LANES), jnp.float32),
            grid=(nb, ns),
            in_specs=[
                pl.BlockSpec((TB, TS, H), lambda i, k: (i, k, 0)),
                pl.BlockSpec((TB, TS, 1), lambda i, k: (i, k, 0)),
                pl.BlockSpec((1, H), lambda i, k: (0, 0)),           # resident
                pl.BlockSpec(memory_space=pltpu.MemorySpace.SMEM),   # bias
            ],
            out_specs=pl.BlockSpec((1, TB, _LANES), lambda i, k: (i, 0, 0)),
            scratch_shapes=[pltpu.VMEM((TB, H), jnp.float32),
                            pltpu.VMEM((TB, 1), jnp.float32)],
            compiler_params=pltpu.CompilerParams(
                dimension_semantics=("parallel", "arbitrary"),
                vmem_limit_bytes=vmem_limit),
            cost_estimate=pl.CostEstimate(
                flops=3 * B * S * H,
                transcendentals=B,
                bytes_accessed=(B * S * H * x_isz + B * S * m_isz
                                + H * 4 + nb * TB * _LANES * 4)),
        )(hidden_states, m3, w2, b2)
        return out.reshape(nb * TB, _LANES)[:B, :1]

    elif pool_type == "cls":
        # CLS slice fused into the kernel: DMA only the first min(8, S)
        # (sublane-aligned) seq rows of each batch tile, use row 0.
        sb = S if S < 8 else 8
        out = pl.pallas_call(
            _cls_pool_classifier_kernel,
            out_shape=jax.ShapeDtypeStruct((nb, TB, _LANES), jnp.float32),
            grid=(nb,),
            in_specs=[
                pl.BlockSpec((TB, sb, H), lambda i: (i, 0, 0)),
                pl.BlockSpec((1, H), lambda i: (0, 0)),
                pl.BlockSpec(memory_space=pltpu.MemorySpace.SMEM),
            ],
            out_specs=pl.BlockSpec((1, TB, _LANES), lambda i: (i, 0, 0)),
            compiler_params=pltpu.CompilerParams(
                dimension_semantics=("parallel",)),
            cost_estimate=pl.CostEstimate(
                flops=2 * B * H,
                transcendentals=0,
                bytes_accessed=(B * sb * H * x_isz + H * 4
                                + nb * TB * _LANES * 4)),
        )(hidden_states, w2, b2)
        return out.reshape(nb * TB, _LANES)[:B, :1]

    else:
        # TODO(synk): gru/lstm pooling (BaseRNN over packed sequences) not implemented.
        raise NotImplementedError(f"pool_type {pool_type!r} not implemented")


# ----------------------------------------------------------------------------
# Pure-JAX reference
# ----------------------------------------------------------------------------
def _reference_forward(hidden_states, attention_mask, w, b, pool_type):
    if pool_type == "mean":
        m = attention_mask.astype(jnp.float32)
        pooled = jnp.sum(hidden_states * m[:, :, None], axis=1) / jnp.maximum(
            jnp.sum(m, axis=1, keepdims=True), 1e-9)
    else:  # cls
        pooled = hidden_states[:, 0, :]
    return pooled @ w.T + b[None, :]


# ----------------------------------------------------------------------------
# Main
# ----------------------------------------------------------------------------
if __name__ == "__main__":
    key = jax.random.PRNGKey(0)
    k_x, k_w, k_b = jax.random.split(key, 3)
    ok = True

    # --- case 1: aligned small shapes -------------------------------------
    B, S, H = 2, 8, 32
    hidden_states = jax.random.normal(k_x, (B, S, H), dtype=jnp.float32)
    lengths = jnp.array([5, 8], dtype=jnp.int32)
    attention_mask = (jnp.arange(S)[None, :] < lengths[:, None]).astype(jnp.float32)
    bound = 1.0 / (H ** 0.5)
    w = jax.random.uniform(k_w, (1, H), dtype=jnp.float32, minval=-bound, maxval=bound)
    b = jax.random.uniform(k_b, (1,), dtype=jnp.float32, minval=-bound, maxval=bound)

    for pool_type in ("mean", "cls"):
        out = fine_tune_head_forward(hidden_states, attention_mask, w, b,
                                     pool_type=pool_type)
        out = jax.block_until_ready(out)
        ref = _reference_forward(hidden_states, attention_mask, w, b, pool_type)
        if out.shape != (B, 1) or not jnp.allclose(out, ref, atol=1e-4, rtol=1e-4):
            ok = False

    # --- case 2: ragged shapes + forced seq tiling ------------------------
    # Exercises partial edge blocks (batch & seq) and the in-kernel tail select.
    B2, S2, H2 = 3, 20, 32
    hs2 = jax.random.normal(k_x, (B2, S2, H2), dtype=jnp.float32)
    lens2 = jnp.array([5, 20, 13], dtype=jnp.int32)
    mask2 = (jnp.arange(S2)[None, :] < lens2[:, None]).astype(jnp.float32)
    w2_ = jax.random.uniform(k_w, (1, H2), dtype=jnp.float32, minval=-bound, maxval=bound)
    b2_ = jax.random.uniform(k_b, (1,), dtype=jnp.float32, minval=-bound, maxval=bound)

    for pool_type in ("mean", "cls"):
        out = fine_tune_head_forward(hs2, mask2, w2_, b2_, pool_type=pool_type,
                                     _max_seq_tile=8)
        out = jax.block_until_ready(out)
        ref = _reference_forward(hs2, mask2, w2_, b2_, pool_type)
        if out.shape != (B2, 1) or not jnp.allclose(out, ref, atol=1e-4, rtol=1e-4):
            ok = False

    if ok:
        print("KERNEL_OK")
</pallas_src>

<mosaic_0001>
module attributes {stable_mosaic.version = 11 : i64} {
  func.func @_mean_pool_classifier_kernel(%arg0: i32, %arg1: i32, %arg2: memref<1x8x32xf32, #tpu.memory_space<vmem>>, %arg3: memref<1x8x1xf32, #tpu.memory_space<vmem>>, %arg4: memref<1x32xf32, #tpu.memory_space<vmem>>, %arg5: memref<1x1xf32, #tpu.memory_space<smem>>, %arg6: memref<1x1x128xf32, #tpu.memory_space<vmem>>, %arg7: memref<1x32xf32, #tpu.memory_space<vmem>>, %arg8: memref<1x1xf32, #tpu.memory_space<vmem>>) attributes {dimension_semantics = [#tpu.dimension_semantics<parallel>, #tpu.dimension_semantics<arbitrary>], iteration_bounds = array<i64: 2, 1>, scalar_prefetch = 0 : i64, scratch_operands = 2 : i64, tpu.core_type = #tpu.core_type<tc>, window_params = [{transform_indices = @transform_0, window_bounds = array<i64: 1, 8, 32>}, {transform_indices = @transform_1, window_bounds = array<i64: 1, 8, 1>}, {pipeline_mode = #tpu.pipeline_mode<synchronous>, transform_indices = @transform_2, window_bounds = array<i64: 1, 32>}, {transform_indices = @transform_3, window_bounds = array<i64: 1, 1>}, {transform_indices = @transform_4, window_bounds = array<i64: 1, 1, 128>}]} {
    %c0_i32 = arith.constant 0 : i32
    %0 = arith.cmpi eq, %arg1, %c0_i32 : i32
    %1 = arith.extui %0 : i1 to i32
    %c0_i32_0 = arith.constant 0 : i32
    %2 = arith.cmpi ne, %1, %c0_i32_0 : i32
    scf.if %2 {
      %cst_17 = arith.constant 0.000000e+00 : f32
      %18 = vector.broadcast %cst_17 : f32 to vector<1x32xf32>
      %c0_18 = arith.constant 0 : index
      %c0_19 = arith.constant 0 : index
      %19 = vector.load %arg7[%c0_18, %c0_19] : memref<1x32xf32, #tpu.memory_space<vmem>>, vector<1x32xf32>
      tpu.vector_store %arg7[%c0_18, %c0_19], %18 {strides = array<i32>} : memref<1x32xf32, #tpu.memory_space<vmem>>, vector<1x32xf32>,
      %cst_20 = arith.constant 0.000000e+00 : f32
      %20 = vector.broadcast %cst_20 : f32 to vector<1x1xf32>
      %c0_21 = arith.constant 0 : index
      %c0_22 = arith.constant 0 : index
      %21 = vector.load %arg8[%c0_21, %c0_22] : memref<1x1xf32, #tpu.memory_space<vmem>>, vector<1x1xf32>
      tpu.vector_store %arg8[%c0_21, %c0_22], %20 {strides = array<i32>} : memref<1x1xf32, #tpu.memory_space<vmem>>, vector<1x1xf32>,
    } else {
    }
    %c0 = arith.constant 0 : index
    %c0_1 = arith.constant 0 : index
    %c0_2 = arith.constant 0 : index
    %3 = vector.load %arg2[%c0, %c0_1, %c0_2] : memref<1x8x32xf32, #tpu.memory_space<vmem>>, vector<1x8x32xf32>
    %c0_3 = arith.constant 0 : index
    %c0_4 = arith.constant 0 : index
    %c0_5 = arith.constant 0 : index
    %4 = vector.load %arg3[%c0_3, %c0_4, %c0_5] : memref<1x8x1xf32, #tpu.memory_space<vmem>>, vector<1x8x1xf32>
    %5 = vector.broadcast %4 : vector<1x8x1xf32> to vector<1x8x32xf32>
    %6 = arith.mulf %3, %5 : vector<1x8x32xf32>
    %c0_6 = arith.constant 0 : index
    %c0_7 = arith.constant 0 : index
    %7 = vector.load %arg7[%c0_6, %c0_7] : memref<1x32xf32, #tpu.memory_space<vmem>>, vector<1x32xf32>
    %cst = arith.constant dense<0.000000e+00> : vector<1x32xf32>
    %8 = vector.multi_reduction <add>, %6, %cst [1] : vector<1x8x32xf32> to vector<1x32xf32>
    %9 = arith.addf %7, %8 : vector<1x32xf32>
    %c0_8 = arith.constant 0 : index
    %c0_9 = arith.constant 0 : index
    %10 = vector.load %arg7[%c0_8, %c0_9] : memref<1x32xf32, #tpu.memory_space<vmem>>, vector<1x32xf32>
    tpu.vector_store %arg7[%c0_8, %c0_9], %9 {strides = array<i32>} : memref<1x32xf32, #tpu.memory_space<vmem>>, vector<1x32xf32>,
    %c0_10 = arith.constant 0 : index
    %c0_11 = arith.constant 0 : index
    %11 = vector.load %arg8[%c0_10, %c0_11] : memref<1x1xf32, #tpu.memory_space<vmem>>, vector<1x1xf32>
    %cst_12 = arith.constant dense<0.000000e+00> : vector<1x1xf32>
    %12 = vector.multi_reduction <add>, %4, %cst_12 [1] : vector<1x8x1xf32> to vector<1x1xf32>
    %13 = arith.addf %11, %12 : vector<1x1xf32>
    %c0_13 = arith.constant 0 : index
    %c0_14 = arith.constant 0 : index
    %14 = vector.load %arg8[%c0_13, %c0_14] : memref<1x1xf32, #tpu.memory_space<vmem>>, vector<1x1xf32>
    tpu.vector_store %arg8[%c0_13, %c0_14], %13 {strides = array<i32>} : memref<1x1xf32, #tpu.memory_space<vmem>>, vector<1x1xf32>,
    %c0_i32_15 = arith.constant 0 : i32
    %15 = arith.cmpi eq, %arg1, %c0_i32_15 : i32
    %16 = arith.extui %15 : i1 to i32
    %c0_i32_16 = arith.constant 0 : i32
    %17 = arith.cmpi ne, %16, %c0_i32_16 : i32
    scf.if %17 {
      %c0_17 = arith.constant 0 : index
      %c0_18 = arith.constant 0 : index
      %18 = vector.load %arg4[%c0_17, %c0_18] : memref<1x32xf32, #tpu.memory_space<vmem>>, vector<1x32xf32>
      %c0_19 = arith.constant 0 : index
      %c0_20 = arith.constant 0 : index
      %19 = vector.load %arg7[%c0_19, %c0_20] : memref<1x32xf32, #tpu.memory_space<vmem>>, vector<1x32xf32>
      %20 = arith.mulf %19, %18 : vector<1x32xf32>
      %cst_21 = arith.constant dense<0.000000e+00> : vector<1xf32>
      %21 = vector.multi_reduction <add>, %20, %cst_21 [1] : vector<1x32xf32> to vector<1xf32>
      %22 = vector.shape_cast %21 : vector<1xf32> to vector<1x1xf32>
      %c0_22 = arith.constant 0 : index
      %c0_23 = arith.constant 0 : index
      %23 = vector.load %arg8[%c0_22, %c0_23] : memref<1x1xf32, #tpu.memory_space<vmem>>, vector<1x1xf32>
      %cst_24 = arith.constant 9.99999971E-10 : f32
      %24 = vector.broadcast %cst_24 : f32 to vector<1x1xf32>
      %25 = arith.maximumf %23, %24 : vector<1x1xf32>
      %26 = tpu.reciprocal %25 {approx = true} : vector<1x1xf32> -> vector<1x1xf32>
      %27 = arith.mulf %25, %26 : vector<1x1xf32>
      %cst_25 = arith.constant 2.000000e+00 : f32
      %28 = vector.broadcast %cst_25 : f32 to vector<1x1xf32>
      %29 = arith.subf %28, %27 : vector<1x1xf32>
      %30 = arith.mulf %26, %29 : vector<1x1xf32>
      %31 = arith.mulf %22, %30 : vector<1x1xf32>
      %c0_26 = arith.constant 0 : index
      %c0_27 = arith.constant 0 : index
      %32 = memref.load %arg5[%c0_26, %c0_27] : memref<1x1xf32, #tpu.memory_space<smem>>
      %33 = vector.broadcast %32 : f32 to vector<1x1xf32>
      %34 = arith.addf %31, %33 : vector<1x1xf32>
      %35 = vector.shape_cast %34 : vector<1x1xf32> to vector<1x1x1xf32>
      %36 = vector.broadcast %35 : vector<1x1x1xf32> to vector<1x1x128xf32>
      %c0_28 = arith.constant 0 : index
      %c0_29 = arith.constant 0 : index
      %c0_30 = arith.constant 0 : index
      %37 = vector.load %arg6[%c0_28, %c0_29, %c0_30] : memref<1x1x128xf32, #tpu.memory_space<vmem>>, vector<1x1x128xf32>
      tpu.vector_store %arg6[%c0_28, %c0_29, %c0_30], %36 {strides = array<i32>} : memref<1x1x128xf32, #tpu.memory_space<vmem>>, vector<1x1x128xf32>,
    } else {
    }
    return
  }
  func.func @transform_0(%arg0: i32, %arg1: i32) -> (i32, i32, i32) {
    %c0_i32 = arith.constant 0 : i32
    %c0_i32_0 = arith.constant 0 : i32
    return %arg0, %arg1, %c0_i32 : i32, i32, i32
  }
  func.func @transform_1(%arg0: i32, %arg1: i32) -> (i32, i32, i32) {
    %c0_i32 = arith.constant 0 : i32
    %c0_i32_0 = arith.constant 0 : i32
    return %arg0, %arg1, %c0_i32 : i32, i32, i32
  }
  func.func @transform_2(%arg0: i32, %arg1: i32) -> (i32, i32) {
    %c0_i32 = arith.constant 0 : i32
    %c0_i32_0 = arith.constant 0 : i32
    %c0_i32_1 = arith.constant 0 : i32
    return %c0_i32, %c0_i32_0 : i32, i32
  }
  func.func @transform_3(%arg0: i32, %arg1: i32) -> (i32, i32) {
    %c0_i32 = arith.constant 0 : i32
    %c0_i32_0 = arith.constant 0 : i32
    %c0_i32_1 = arith.constant 0 : i32
    return %c0_i32, %c0_i32_0 : i32, i32
  }
  func.func @transform_4(%arg0: i32, %arg1: i32) -> (i32, i32, i32) {
    %c0_i32 = arith.constant 0 : i32
    %c0_i32_0 = arith.constant 0 : i32
    %c0_i32_1 = arith.constant 0 : i32
    return %arg0, %c0_i32, %c0_i32_0 : i32, i32, i32
  }
}

</mosaic_0001>

<llo_original>
// kernel: fine_tune_head_forward.1
$region0: #{fine_tune_head_forward.1}
  #allocation0 [shape = 'u32[]', space=smem, size = 0x4, offset = 0x4, fixed_abs, tag = 'smem constant byte address 0x4 - core index']
  #allocation1 [shape = 'u32[144,128]{1,0:T(1,128)}', space=vmem, size = 0x12000, scoped, tag = 'internal scratch']
  #allocation2 [shape = 'f32[1,32]{1,0:T(1,128)}', space=vmem, size = 0x200, scoped, tag = 'scratch operand']
  #allocation3 [shape = 'f32[1,1]{1,0:T(1,128)}', space=vmem, size = 0x200, scoped, tag = 'scratch operand']
  #allocation4 [shape = 'f32[1,1]{1,0:T(1,128)S(6)}', space=smem, size = 0x200, scoped, tag = 'scoped memory for fine_tune_head_forward.1']
  %s0 = inlined_call_operand.vmem [shape: f32[2,8,32], index: 0, kind: input, shape index: {}]
  %s1 = inlined_call_operand.vmem [shape: f32[2,8,1], index: 1, kind: input, shape index: {}]
  %s2 = inlined_call_operand.vmem [shape: f32[1,32], index: 2, kind: input, shape index: {}]
  %s3 = inlined_call_operand.<no memory space> [shape: f32[1,1], index: 3, kind: input, shape index: {}]
  %s4 = inlined_call_operand.vmem [shape: f32[2,1,128], index: 4, kind: output, shape index: {}]
  %s5 = sld [smem:[#allocation0]]
  $region57: #{fine_tune_head_forward.1} parent=0
    _
  %s7 = ssub.s32 1, %s5
  %s8 = scalar_select 0, %s7, %s5
  %9 = sst [smem:[#allocation4]] %s3
  loop: start=0, step=1, limit=4
  $region2: #{fine_tune_head_forward.1} parent=0 // loop_pre_header
    _
  $region3: #{fine_tune_head_forward.1} parent=0 // loop_header
    %s11 = sphi 0, %s15
    %p12 = scmp.ge.s32.totalorder %s11, 4
    %s18 = sphi 0, %s30
    %s19 = sphi 0, %s26
    %s20 = sphi 0, %s18
    %s21 = sphi 0, %s19
    %s22 = sphi 0, %s20
    %s23 = sphi 0, %s21
    %s35 = sphi 0, %s37
    %s38 = sphi 0, %s35
    %s39 = sphi 0, %s38
    %s55 = sphi 0, %s39
    %s63 = sphi 0, %s65
    %s66 = sphi 0, %s63
    %s67 = sphi 0, %s66
    %s83 = sphi 0, %s67
    %s87 = sphi 0, %s87
    %s89 = sphi 0, %s87
    %s90 = sphi 0, %s89
    %s104 = sphi 0, %s90
    %s108 = sphi 0, %s108
    %s110 = sphi 0, %s108
    %s111 = sphi 0, %s110
    %s125 = sphi 0, %s111
    %s131 = sphi 0, %s133
    %s134 = sphi 0, %s131
    %s135 = sphi 0, %s134
    %s151 = sphi 0, %s135
  $region4: #{fine_tune_head_forward.1} parent=0 // loop_header_branch
    %14 = sbr.rel (%p12) target = $region8
  $region5: #{fine_tune_head_forward.1} parent=0 // loop_body
    %s16 = ssub.s32 %s11, 1
    %s17 = ssub.s32 %s11, 2
    %s24 = sadd.s32 1, %s19
    %p25 = scmp.ge.s32.totalorder %s24, 1
    %s26 = scalar_select %p25, 0, %s24
    %s27 = sadd.s32 1, %s18
    %s28 = scalar_select %p25, %s27, %s18
    %p29 = scmp.ge.s32.totalorder %s28, 2
    %s30 = scalar_select %p29, 0, %s28
    %s31 = ssub.s32 %s18, %s30
    %s32 = ssub.s32 %s19, %s26
    %s33 = sor.u32 %s31, %s32
    %p34 = scmp.eq.s32.totalorder %s33, 0
    %s36 = sadd.s32 %s35, 1
    %s37 = scalar_select %p34, %s35, %s36
    %p40 = pneg %p34
    %p41 = scmp.eq.s32.totalorder %s11, 1
    %p42 = por %p40, %p41
    %p43 = scmp.ne.s32.totalorder %s35, %s38
    %p44 = scmp.eq.s32.totalorder %s11, 0
    %p45 = por %p43, %p44
    %p46 = scmp.ne.s32.totalorder %s35, %s38
    %p47 = scmp.eq.s32.totalorder %s16, 1
    %p48 = por %p46, %p47
    %p49 = scmp.ne.s32.totalorder %s38, %s39
    %p50 = scmp.eq.s32.totalorder %s16, 0
    %p51 = por %p49, %p50
    %p52 = scmp.ne.s32.totalorder %s38, %s39
    %p53 = scmp.eq.s32.totalorder %s17, 1
    %p54 = por %p52, %p53
    %p56 = scmp.ne.s32.totalorder %s39, %s55
    %p57 = scmp.eq.s32.totalorder %s17, 0
    %p58 = por %p56, %p57
    %s59 = ssub.s32 %s18, %s30
    %s60 = ssub.s32 %s19, %s26
    %s61 = sor.u32 %s59, %s60
    %p62 = scmp.eq.s32.totalorder %s61, 0
    %s64 = sadd.s32 %s63, 1
    %s65 = scalar_select %p62, %s63, %s64
    %p68 = pneg %p62
    %p69 = scmp.eq.s32.totalorder %s11, 1
    %p70 = por %p68, %p69
    %p71 = scmp.ne.s32.totalorder %s63, %s66
    %p72 = scmp.eq.s32.totalorder %s11, 0
    %p73 = por %p71, %p72
    %p74 = scmp.ne.s32.totalorder %s63, %s66
    %p75 = scmp.eq.s32.totalorder %s16, 1
    %p76 = por %p74, %p75
    %p77 = scmp.ne.s32.totalorder %s66, %s67
    %p78 = scmp.eq.s32.totalorder %s16, 0
    %p79 = por %p77, %p78
    %p80 = scmp.ne.s32.totalorder %s66, %s67
    %p81 = scmp.eq.s32.totalorder %s17, 1
    %p82 = por %p80, %p81
    %p84 = scmp.ne.s32.totalorder %s67, %s83
    %p85 = scmp.eq.s32.totalorder %s17, 0
    %p86 = por %p84, %p85
    %s88 = sadd.s32 %s87, 1
    %p91 = scmp.eq.s32.totalorder %s11, 1
    %p92 = scmp.ne.s32.totalorder %s87, %s89
    %p93 = scmp.eq.s32.totalorder %s11, 0
    %p94 = por %p92, %p93
    %p95 = scmp.ne.s32.totalorder %s87, %s89
    %p96 = scmp.eq.s32.totalorder %s16, 1
    %p97 = por %p95, %p96
    %p98 = scmp.ne.s32.totalorder %s89, %s90
    %p99 = scmp.eq.s32.totalorder %s16, 0
    %p100 = por %p98, %p99
    %p101 = scmp.ne.s32.totalorder %s89, %s90
    %p102 = scmp.eq.s32.totalorder %s17, 1
    %p103 = por %p101, %p102
    %p105 = scmp.ne.s32.totalorder %s90, %s104
    %p106 = scmp.eq.s32.totalorder %s17, 0
    %p107 = por %p105, %p106
    %s109 = sadd.s32 %s108, 1
    %p112 = scmp.eq.s32.totalorder %s11, 1
    %p113 = scmp.ne.s32.totalorder %s108, %s110
    %p114 = scmp.eq.s32.totalorder %s11, 0
    %p115 = por %p113, %p114
    %p116 = scmp.ne.s32.totalorder %s108, %s110
    %p117 = scmp.eq.s32.totalorder %s16, 1
    %p118 = por %p116, %p117
    %p119 = scmp.ne.s32.totalorder %s110, %s111
    %p120 = scmp.eq.s32.totalorder %s16, 0
    %p121 = por %p119, %p120
    %p122 = scmp.ne.s32.totalorder %s110, %s111
    %p123 = scmp.eq.s32.totalorder %s17, 1
    %p124 = por %p122, %p123
    %p126 = scmp.ne.s32.totalorder %s111, %s125
    %p127 = scmp.eq.s32.totalorder %s17, 0
    %p128 = por %p126, %p127
    %s129 = ssub.s32 %s18, %s30
    %p130 = scmp.eq.s32.totalorder %s129, 0
    %s132 = sadd.s32 %s131, 1
    %s133 = scalar_select %p130, %s131, %s132
    %p136 = pneg %p130
    %p137 = scmp.eq.s32.totalorder %s11, 1
    %p138 = por %p136, %p137
    %p139 = scmp.ne.s32.totalorder %s131, %s134
    %p140 = scmp.eq.s32.totalorder %s11, 0
    %p141 = por %p139, %p140
    %p142 = scmp.ne.s32.totalorder %s131, %s134
    %p143 = scmp.eq.s32.totalorder %s16, 1
    %p144 = por %p142, %p143
    %p145 = scmp.ne.s32.totalorder %s134, %s135
    %p146 = scmp.eq.s32.totalorder %s16, 0
    %p147 = por %p145, %p146
    %p148 = scmp.ne.s32.totalorder %s134, %s135
    %p149 = scmp.eq.s32.totalorder %s17, 1
    %p150 = por %p148, %p149
    %p152 = scmp.ne.s32.totalorder %s135, %s151
    %p153 = scmp.eq.s32.totalorder %s17, 0
    %p154 = por %p152, %p153
    %p155 = scmp.le.s32.totalorder 1, %s11
    %p156 = scmp.lt.s32.totalorder %s11, 3
    %p157 = pnand %p155, %p156
    %p158 = pneg %p157
    // Predicated region
    $region9: #{fine_tune_head_forward.1} parent=5 // pred_check
      _
    $region10: #{fine_tune_head_forward.1} parent=5 // pred_check_branch
      %160 = sbr.rel (%p157) target = $region12
    $region11: #{fine_tune_head_forward.1} parent=5 // pred_region
      %s161 = ssub.s32 %s11, 1
      // Predicated region
      $region13: #{fine_tune_head_forward.1} parent=11 // pred_check
        %p162 = pneg %p100
      $region14: #{fine_tune_head_forward.1} parent=11 // pred_check_branch
        %164 = sbr.rel (%p162) target = $region16
      $region15: #{fine_tune_head_forward.1} parent=11 // pred_region
        _
      $region16: #{fine_tune_head_forward.1} parent=11 // pred_fallthru
        _
      // Predicated region
      $region17: #{fine_tune_head_forward.1} parent=11 // pred_check
        %p165 = pneg %p121
      $region18: #{fine_tune_head_forward.1} parent=11 // pred_check_branch
        %167 = sbr.rel (%p165) target = $region20
      $region19: #{fine_tune_head_forward.1} parent=11 // pred_region
        _
      $region20: #{fine_tune_head_forward.1} parent=11 // pred_fallthru
        _
    $region12: #{fine_tune_head_forward.1} parent=5 // pred_fallthru
      _
    %p168 = scmp.lt.s32.totalorder %s11, 2
    // Predicated region
    $region21: #{fine_tune_head_forward.1} parent=5 // pred_check
      %p169 = pneg %p168
    $region22: #{fine_tune_head_forward.1} parent=5 // pred_check_branch
      %171 = sbr.rel (%p169) target = $region24
    $region23: #{fine_tune_head_forward.1} parent=5 // pred_region
      // Predicated region
      $region25: #{fine_tune_head_forward.1} parent=23 // pred_check
        %p172 = pneg %p45
      $region26: #{fine_tune_head_forward.1} parent=23 // pred_check_branch
        %174 = sbr.rel (%p172) target = $region28
      $region27: #{fine_tune_head_forward.1} parent=23 // pred_region
        %p175 = scmp.lt.s32.totalorder %s18, 1
        %s176 = scalar_select %p175, %s18, 1
        %p177 = scmp.lt.s32.totalorder %s19, 0
        %s178 = scalar_select %p177, %s19, 0
        %s179 = sadd.s32 %s178, %s176
        %s180 = smul.addr %s179, 8
        %s181 = scalar_lea.vmem %s0, %s180
      $region28: #{fine_tune_head_forward.1} parent=23 // pred_fallthru
        _
      // Predicated region
      $region29: #{fine_tune_head_forward.1} parent=23 // pred_check
        %p182 = pneg %p73
      $region30: #{fine_tune_head_forward.1} parent=23 // pred_check_branch
        %184 = sbr.rel (%p182) target = $region32
      $region31: #{fine_tune_head_forward.1} parent=23 // pred_region
        %p185 = scmp.lt.s32.totalorder %s18, 1
        %s186 = scalar_select %p185, %s18, 1
        %p187 = scmp.lt.s32.totalorder %s19, 0
        %s188 = scalar_select %p187, %s19, 0
        %s189 = sadd.s32 %s188, %s186
        %s190 = smul.addr %s189, 8
        %s191 = scalar_lea.vmem %s1, %s190
      $region32: #{fine_tune_head_forward.1} parent=23 // pred_fallthru
        _
    $region24: #{fine_tune_head_forward.1} parent=5 // pred_fallthru
      _
    %p192 = scmp.le.s32.totalorder 1, %s11
    %p193 = scmp.lt.s32.totalorder %s11, 3
    %p194 = pnand %p192, %p193
    %p195 = pneg %p194
    // Predicated region
    $region33: #{fine_tune_head_forward.1} parent=5 // pred_check
      _
    $region34: #{fine_tune_head_forward.1} parent=5 // pred_check_branch
      %197 = sbr.rel (%p194) target = $region36
    $region35: #{fine_tune_head_forward.1} parent=5 // pred_region
      %s198 = ssub.s32 %s11, 1
      %p199 = scmp.lt.s32.totalorder %s20, 1
      %s200 = scalar_select %p199, %s20, 1
      %p201 = scmp.lt.s32.totalorder %s21, 0
      %s202 = scalar_select %p201, %s21, 0
      %s203 = sadd.s32 %s202, %s200
      %s204 = smul.addr %s203, 8
      %s205 = scalar_lea.vmem %s0, %s204
      %p206 = pneg %p51
      %p207 = pneg %p48
      %p208 = scmp.lt.s32.totalorder %s20, 1
      %s209 = scalar_select %p208, %s20, 1
      %p210 = scmp.lt.s32.totalorder %s21, 0
      %s211 = scalar_select %p210, %s21, 0
      %s212 = sadd.s32 %s211, %s209
      %s213 = smul.addr %s212, 8
      %s214 = scalar_lea.vmem %s1, %s213
      %p215 = pneg %p79
      %p216 = pneg %p76
      %p217 = pneg %p100
      %p218 = pneg %p97
      %p219 = pneg %p121
      %p220 = pneg %p118
      %p221 = pneg %p147
      %p222 = pneg %p144
      %p223 = scmp.lt.s32.totalorder %s20, 1
      %s224 = scalar_select %p223, %s20, 1
      %s225 = scalar_lea.vmem %s4, %s224
      %p226 = scmp.lt.s32.totalorder %s20, 1
      %s227 = scalar_select %p226, %s20, 1
      %p228 = scmp.lt.s32.totalorder %s21, 0
      %s229 = scalar_select %p228, %s21, 0
      %s230 = sadd.s32 %s229, %s227
      %s231 = smul.addr %s230, 8
      %s232 = scalar_lea.vmem %s0, %s231
      %p233 = scmp.lt.s32.totalorder %s20, 1
      %s234 = scalar_select %p233, %s20, 1
      %p235 = scmp.lt.s32.totalorder %s21, 0
      %s236 = scalar_select %p235, %s21, 0
      %s237 = sadd.s32 %s236, %s234
      %s238 = smul.addr %s237, 8
      %s239 = scalar_lea.vmem %s1, %s238
      %p240 = scmp.lt.s32.totalorder %s20, 1
      %s241 = scalar_select %p240, %s20, 1
      %s242 = scalar_lea.vmem %s4, %s241
      %p243 = scmp.eq.s32.totalorder %s21, 0
      // Predicated region
      $region37: #{fine_tune_head_forward.1} parent=35 // pred_check
        %p244 = pneg %p243
      $region38: #{fine_tune_head_forward.1} parent=35 // pred_check_branch
        %246 = sbr.rel (%p244) target = $region40
      $region39: #{fine_tune_head_forward.1} parent=35 // pred_region
        %vm247 = vcmask 253952
        %248 = vst.msk [vmem:[#allocation2] sm:$0x1] %vm247, 0.0
        %vm249 = vcmask 0
        %250 = vst.msk [vmem:[#allocation3] sm:$0x1] %vm249, 0.0
      $region40: #{fine_tune_head_forward.1} parent=35 // pred_fallthru
        _
      %v251 = vld [vmem:[%s232] sm:$0xff]
      %v252 = vld [vmem:[%s239] sm:$0xff]
      %254 = vset.pattern.permute.xlu0 0
      %255 = vperm.xlu0 %254, %v252
      %v256 = vpop.permute.xlu0 %255
      %v258 = vmul.f32 %v251, %v256
      %v259 = vld [vmem:[#allocation2] sm:$0x1]
      %vm260 = vcmask 261120
      %v261 = vsel %vm260, %v258, 0.0
      %v262 = vrot.slane %v261, 4
      %v263 = vadd.f32 %v261, %v262
      %v264 = vrot.slane %v263, 2
      %v265 = vadd.f32 %v263, %v264
      %v266 = vrot.slane %v265, 1
      %v267 = vadd.f32 %v265, %v266
      %v268 = vadd.f32 %v259, %v267
      %vm269 = vcmask 253952
      %270 = vst.msk [vmem:[#allocation2] sm:$0x1] %vm269, %v268
      %v271 = vld [vmem:[#allocation3] sm:$0x1]
      %vm272 = vcmask 7168
      %v273 = vsel %vm272, %v252, 0.0
      %v274 = vrot.slane %v273, 4
      %v275 = vadd.f32 %v273, %v274
      %v276 = vrot.slane %v275, 2
      %v277 = vadd.f32 %v275, %v276
      %v278 = vrot.slane %v277, 1
      %v279 = vadd.f32 %v277, %v278
      %v280 = vadd.f32 %v271, %v279
      %vm281 = vcmask 0
      %282 = vst.msk [vmem:[#allocation3] sm:$0x1] %vm281, %v280
      // Predicated region
      $region41: #{fine_tune_head_forward.1} parent=35 // pred_check
        %p283 = pneg %p243
      $region42: #{fine_tune_head_forward.1} parent=35 // pred_check_branch
        %285 = sbr.rel (%p283) target = $region44
      $region43: #{fine_tune_head_forward.1} parent=35 // pred_region
        %v286 = vld [vmem:[%s2] sm:$0x1]
        %v287 = vld [vmem:[#allocation2] sm:$0x1]
        %v288 = vmul.f32 %v287, %v286
        %v289 = vsel %vm269, %v288, 0.0
        %290 = vadd.xlane.f32.xlu0 %v289
        %v291 = vpop.xlane.xlu0 %290
        %v292 = vld [vmem:[#allocation3] sm:$0x1]
        %v293 = vmax.f32 %v292, 1e-09
        %v294 = vrcp.pop %v293
        %v295 = vmul.f32 %v293, %v294
        %v296 = vsub.f32 2.0, %v295
        %v297 = vmul.f32 %v294, %v296
        %v298 = vmul.f32 %v291, %v297
        %s299 = sld [smem:[#allocation4]]
        %v300 = vstv %s299
        %v301 = vadd.f32 %v298, %v300
        %303 = vset.pattern.permute.xlu0 0
        %304 = vperm.xlu0 %303, %v301
        %v305 = vpop.permute.xlu0 %304
        %307 = vst [vmem:[%s242] sm:$0x1] %v305
      $region44: #{fine_tune_head_forward.1} parent=35 // pred_fallthru
        _
      %p308 = scmp.lt.s32.totalorder %s20, 1
      %s309 = scalar_select %p308, %s20, 1
      %s310 = scalar_lea.vmem %s4, %s309
      // Predicated region
      $region45: #{fine_tune_head_forward.1} parent=35 // pred_check
        %p311 = pneg %p144
      $region46: #{fine_tune_head_forward.1} parent=35 // pred_check_branch
        %313 = sbr.rel (%p311) target = $region48
      $region47: #{fine_tune_head_forward.1} parent=35 // pred_region
        _
      $region48: #{fine_tune_head_forward.1} parent=35 // pred_fallthru
        _
    $region36: #{fine_tune_head_forward.1} parent=5 // pred_fallthru
      _
    %p314 = scmp.le.s32.totalorder 2, %s11
    // Predicated region
    $region49: #{fine_tune_head_forward.1} parent=5 // pred_check
      %p315 = pneg %p314
    $region50: #{fine_tune_head_forward.1} parent=5 // pred_check_branch
      %317 = sbr.rel (%p315) target = $region52
    $region51: #{fine_tune_head_forward.1} parent=5 // pred_region
      %s318 = ssub.s32 %s11, 2
      // Predicated region
      $region53: #{fine_tune_head_forward.1} parent=51 // pred_check
        %p319 = pneg %p150
      $region54: #{fine_tune_head_forward.1} parent=51 // pred_check_branch
        %321 = sbr.rel (%p319) target = $region56
      $region55: #{fine_tune_head_forward.1} parent=51 // pred_region
        %p322 = scmp.lt.s32.totalorder %s22, 1
        %s323 = scalar_select %p322, %s22, 1
        %s324 = scalar_lea.vmem %s4, %s323
      $region56: #{fine_tune_head_forward.1} parent=51 // pred_fallthru
        _
    $region52: #{fine_tune_head_forward.1} parent=5 // pred_fallthru
      _
  $region6: #{fine_tune_head_forward.1} parent=0 // loop_footer
    %s15 = sadd.s32 1, %s11
  $region7: #{fine_tune_head_forward.1} parent=0 // loop_footer_branch
    %10 = sbr.rel target = $region3
  $region8: #{fine_tune_head_forward.1} parent=0 // loop_exit
    _

</llo_original>
